<compile_context>
chip_gen: v7x
topology: tpu7x:2x2x1
jax: 0.10.0
libtpu: 0.0.40
codegen_flags: <defaults>
</compile_context>

<pallas_src>
import jax
import jax.numpy as jnp
from jax.experimental import pallas as pl
from jax.experimental.pallas import tpu as pltpu


def _gradient_kernel(x_ref, out_ref):
    # x_ref:   (Nb, H,  W )  float32 in VMEM
    # out_ref: (Nb, H-2,W-2) float32 in VMEM (final, lane-aligned result)
    x = x_ref[...]
    _, H, W = x.shape
    Ho = out_ref.shape[1]          # H - 2
    Wo = out_ref.shape[2]          # W - 2

    # Horizontal (lane-axis) pass of the separable Sobel, aligned to the
    # OUTPUT column index:  h[:, :, c] = x[:, :, c+2] - x[:, :, c].
    # pltpu.roll runs on the XLU slot, which is otherwise idle here; the
    # cyclic wraparound only pollutes columns >= W-2, which are cropped by
    # the store below.
    h = pltpu.roll(x, W - 2, axis=2) - x

    # Vertical (sublane-axis) pass with [1, 2, 1] via row slices.
    g = h[:, 0:Ho, :] + 2.0 * h[:, 1:Ho + 1, :] + h[:, 2:H, :]

    # weight_x == weight_y in Gradient_Net  =>  |grad_x| + |grad_y| == 2*|g|.
    # Single fused, lane-aligned store of the valid Wo columns.
    out_ref[...] = 2.0 * jnp.abs(g[:, :, 0:Wo])


def _pick_batch_block(N, H, W, target_bytes=2 << 20):
    """Largest divisor of N whose input block is <= ~2 MiB (keeps the
    double-buffered in+out footprint well under the scoped VMEM limit on
    every chip, while amortizing the ~0.35 us per-grid-step overhead)."""
    per_image = H * W * 4
    nb = max(1, min(N, target_bytes // max(per_image, 1)))
    while N % nb:
        nb -= 1
    return nb


def gradient_net_forward(x):
    """x: (N, 1, H, W) float -> (N, 1, H-2, W-2) float32, matching
    Gradient_Net.forward with pad=0."""
    N, C, H, W = x.shape
    assert C == 1, "Gradient_Net conv weight has in_channels == 1"
    Ho, Wo = H - 2, W - 2

    x_sq = x.reshape(N, H, W).astype(jnp.float32)   # squeeze C=1 (free)
    nb = _pick_batch_block(N, H, W)

    # TODO(synk): for very large single images (N==1), add a row-tiled grid
    # axis with a 2-row halo so both v7x TensorCores are fed; batch-only
    # tiling covers the module's training use-case.
    out = pl.pallas_call(
        _gradient_kernel,
        out_shape=jax.ShapeDtypeStruct((N, Ho, Wo), jnp.float32),
        grid=(N // nb,),
        in_specs=[pl.BlockSpec((nb, H, W), lambda n: (n, 0, 0))],
        out_specs=pl.BlockSpec((nb, Ho, Wo), lambda n: (n, 0, 0)),
        compiler_params=pltpu.CompilerParams(
            dimension_semantics=("parallel",),
            vmem_limit_bytes=32 << 20),
    )(x_sq)

    return out.reshape(N, 1, Ho, Wo)


def _reference(x):
    # Pure-JAX reference (lax conv) reproducing the PyTorch module exactly.
    sobel = jnp.array([[-1.0, 0.0, 1.0],
                       [-2.0, 0.0, 2.0],
                       [-1.0, 0.0, 1.0]], dtype=jnp.float32).reshape(1, 1, 3, 3)
    xf = x.astype(jnp.float32)
    dn = jax.lax.conv_dimension_numbers(xf.shape, sobel.shape,
                                        ("NCHW", "OIHW", "NCHW"))
    gx = jax.lax.conv_general_dilated(xf, sobel, (1, 1), "VALID",
                                      dimension_numbers=dn)
    gy = jax.lax.conv_general_dilated(xf, sobel, (1, 1), "VALID",
                                      dimension_numbers=dn)
    return jnp.abs(gx) + jnp.abs(gy)


if __name__ == "__main__":
    key = jax.random.PRNGKey(0)

    # Small lane-friendly demo shape implied by the module (C must be 1).
    N, C, H, W = 2, 1, 128, 128
    x = jax.random.normal(key, (N, C, H, W), dtype=jnp.float32)

    out = jax.block_until_ready(gradient_net_forward(x))
    ref = _reference(x)
    assert out.shape == (N, 1, H - 2, W - 2)
    assert jnp.allclose(out, ref, atol=1e-4, rtol=1e-4)

    # A second shape (odd batch, wide image) to exercise different extents.
    x2 = jax.random.normal(jax.random.PRNGKey(0), (3, 1, 64, 256),
                           dtype=jnp.float32)
    out2 = jax.block_until_ready(gradient_net_forward(x2))
    assert out2.shape == (3, 1, 62, 254)
    assert jnp.allclose(out2, _reference(x2), atol=1e-4, rtol=1e-4)

    print("KERNEL_OK")
</pallas_src>

<mosaic_0001>
module attributes {stable_mosaic.version = 11 : i64} {
  func.func @_gradient_kernel(%arg0: i32, %arg1: memref<2x128x128xf32, #tpu.memory_space<vmem>>, %arg2: memref<2x126x126xf32, #tpu.memory_space<vmem>>) attributes {dimension_semantics = [#tpu.dimension_semantics<parallel>], iteration_bounds = array<i64: 1>, scalar_prefetch = 0 : i64, scratch_operands = 0 : i64, tpu.core_type = #tpu.core_type<tc>, window_params = [{transform_indices = @transform_0, window_bounds = array<i64: 2, 128, 128>}, {transform_indices = @transform_1, window_bounds = array<i64: 2, 126, 126>}]} {
    %c0 = arith.constant 0 : index
    %c0_0 = arith.constant 0 : index
    %c0_1 = arith.constant 0 : index
    %0 = vector.load %arg1[%c0, %c0_0, %c0_1] : memref<2x128x128xf32, #tpu.memory_space<vmem>>, vector<2x128x128xf32>
    %c126_i32 = arith.constant 126 : i32
    %1 = tpu.dynamic_rotate %0 by %c126_i32 dim 2 : vector<2x128x128xf32>, i32 -> vector<2x128x128xf32>
    %2 = arith.subf %1, %0 : vector<2x128x128xf32>
    %3 = vector.extract_strided_slice %2 {offsets = [0, 0, 0], sizes = [2, 126, 128], strides = [1, 1, 1]} : vector<2x128x128xf32> to vector<2x126x128xf32>
    %4 = vector.extract_strided_slice %2 {offsets = [0, 1, 0], sizes = [2, 126, 128], strides = [1, 1, 1]} : vector<2x128x128xf32> to vector<2x126x128xf32>
    %cst = arith.constant 2.000000e+00 : f32
    %5 = vector.broadcast %cst : f32 to vector<2x126x128xf32>
    %6 = arith.mulf %5, %4 : vector<2x126x128xf32>
    %7 = arith.addf %3, %6 : vector<2x126x128xf32>
    %8 = vector.extract_strided_slice %2 {offsets = [0, 2, 0], sizes = [2, 126, 128], strides = [1, 1, 1]} : vector<2x128x128xf32> to vector<2x126x128xf32>
    %9 = arith.addf %7, %8 : vector<2x126x128xf32>
    %10 = vector.extract_strided_slice %9 {offsets = [0, 0, 0], sizes = [2, 126, 126], strides = [1, 1, 1]} : vector<2x126x128xf32> to vector<2x126x126xf32>
    %11 = math.absf %10 : vector<2x126x126xf32>
    %cst_2 = arith.constant 2.000000e+00 : f32
    %12 = vector.broadcast %cst_2 : f32 to vector<2x126x126xf32>
    %13 = arith.mulf %12, %11 : vector<2x126x126xf32>
    %c0_3 = arith.constant 0 : index
    %c0_4 = arith.constant 0 : index
    %c0_5 = arith.constant 0 : index
    %14 = vector.load %arg2[%c0_3, %c0_4, %c0_5] : memref<2x126x126xf32, #tpu.memory_space<vmem>>, vector<2x126x126xf32>
    tpu.vector_store %arg2[%c0_3, %c0_4, %c0_5], %13 {strides = array<i32>} : memref<2x126x126xf32, #tpu.memory_space<vmem>>, vector<2x126x126xf32>,
    return
  }
  func.func @transform_0(%arg0: i32) -> (i32, i32, i32) {
    %c0_i32 = arith.constant 0 : i32
    %c0_i32_0 = arith.constant 0 : i32
    %c0_i32_1 = arith.constant 0 : i32
    return %arg0, %c0_i32, %c0_i32_0 : i32, i32, i32
  }
  func.func @transform_1(%arg0: i32) -> (i32, i32, i32) {
    %c0_i32 = arith.constant 0 : i32
    %c0_i32_0 = arith.constant 0 : i32
    %c0_i32_1 = arith.constant 0 : i32
    return %arg0, %c0_i32, %c0_i32_0 : i32, i32, i32
  }
}

</mosaic_0001>

<llo_original>
// kernel: tpu_custom_call.1
$region0: #{tpu_custom_call.1}
  #allocation0 [shape = 'u32[]', space=smem, size = 0x4, offset = 0x4, fixed_abs, tag = 'smem constant byte address 0x4 - core index']
  #allocation1 [shape = 'u32[144,128]{1,0:T(1,128)}', space=vmem, size = 0x12000, scoped, tag = 'internal scratch']
  %s0 = inlined_call_operand.hbm [shape: f32[2,128,128], index: 0, kind: input, shape index: {}]
  %s1 = inlined_call_operand.vmem [shape: f32[2,126,126], index: 1, kind: output, shape index: {}]
  %s2 = sld [smem:[#allocation0]]
  $region18: #{tpu_custom_call.1} parent=0
    _
  %s4 = ssub.s32 1, %s2
  %s5 = scalar_select 0, %s4, %s2
  $region1: #{tpu_custom_call.1} parent=0
    #allocation2 [shape = 'u8[131072]{0}', space=vmem, size = 0x20000, scoped, tag = 'input window, operand 0, single buffered']
    #allocation3 [shape = 's32[1]{0}', space=sflag, size = 0x4, scoped, tag = 'scoped memory for tpu_custom_call.1']
    %6 = vsyncpa [#allocation3], 0
    // Predicated region
    $region2: #{tpu_custom_call.1} parent=1 // pred_check
      _
    $region3: #{tpu_custom_call.1} parent=1 // pred_check_branch
      %8 = sbr.rel (0) target = $region5
    $region4: #{tpu_custom_call.1} parent=1 // pred_region
      %s10 = ssub.s32 4096, 4096
      %11 = vsyncadd [#allocation3], %s10
      %s12 = sshll.u32 [#allocation2], 4
      %s13 = int_to_ptr.vmem [resolvable:$true] %s12
      %18 = dma.hbm_to_vmem [thread:$0]  %s0, 4096, %s13, [#allocation3], 128, 128, 8
    $region5: #{tpu_custom_call.1} parent=1 // pred_fallthru
      _
    // Predicated region
    $region6: #{tpu_custom_call.1} parent=1 // pred_check
      _
    $region7: #{tpu_custom_call.1} parent=1 // pred_check_branch
      %20 = sbr.rel (0) target = $region9
    $region8: #{tpu_custom_call.1} parent=1 // pred_region
      %21 = dma.done [#allocation3], 4096
    $region9: #{tpu_custom_call.1} parent=1 // pred_fallthru
      _
    %v22 = vld [vmem:[#allocation2] sm:$0xff]
    %v23 = vld [vmem:[#allocation2 + $0x8] sm:$0xff]
    %v24 = vld [vmem:[#allocation2 + $0x10] sm:$0xff]
    %v25 = vld [vmem:[#allocation2 + $0x18] sm:$0xff]
    %v26 = vld [vmem:[#allocation2 + $0x20] sm:$0xff]
    %v27 = vld [vmem:[#allocation2 + $0x28] sm:$0xff]
    %v28 = vld [vmem:[#allocation2 + $0x30] sm:$0xff]
    %v29 = vld [vmem:[#allocation2 + $0x38] sm:$0xff]
    %v30 = vld [vmem:[#allocation2 + $0x40] sm:$0xff]
    %v31 = vld [vmem:[#allocation2 + $0x48] sm:$0xff]
    %v32 = vld [vmem:[#allocation2 + $0x50] sm:$0xff]
    %v33 = vld [vmem:[#allocation2 + $0x58] sm:$0xff]
    %v34 = vld [vmem:[#allocation2 + $0x60] sm:$0xff]
    %v35 = vld [vmem:[#allocation2 + $0x68] sm:$0xff]
    %v36 = vld [vmem:[#allocation2 + $0x70] sm:$0xff]
    %v37 = vld [vmem:[#allocation2 + $0x78] sm:$0xff]
    %v38 = vld [vmem:[#allocation2 + $0x80] sm:$0xff]
    %v39 = vld [vmem:[#allocation2 + $0x88] sm:$0xff]
    %v40 = vld [vmem:[#allocation2 + $0x90] sm:$0xff]
    %v41 = vld [vmem:[#allocation2 + $0x98] sm:$0xff]
    %v42 = vld [vmem:[#allocation2 + $0xa0] sm:$0xff]
    %v43 = vld [vmem:[#allocation2 + $0xa8] sm:$0xff]
    %v44 = vld [vmem:[#allocation2 + $0xb0] sm:$0xff]
    %v45 = vld [vmem:[#allocation2 + $0xb8] sm:$0xff]
    %v46 = vld [vmem:[#allocation2 + $0xc0] sm:$0xff]
    %v47 = vld [vmem:[#allocation2 + $0xc8] sm:$0xff]
    %v48 = vld [vmem:[#allocation2 + $0xd0] sm:$0xff]
    %v49 = vld [vmem:[#allocation2 + $0xd8] sm:$0xff]
    %v50 = vld [vmem:[#allocation2 + $0xe0] sm:$0xff]
    %v51 = vld [vmem:[#allocation2 + $0xe8] sm:$0xff]
    %v52 = vld [vmem:[#allocation2 + $0xf0] sm:$0xff]
    %v53 = vld [vmem:[#allocation2 + $0xf8] sm:$0xff]
    %54 = vrot.lane.b32.xlu0 %v22, 126
    %v55 = vpop.permute.xlu0 %54
    %56 = vrot.lane.b32.xlu0 %v23, 126
    %v57 = vpop.permute.xlu0 %56
    %58 = vrot.lane.b32.xlu0 %v24, 126
    %v59 = vpop.permute.xlu0 %58
    %60 = vrot.lane.b32.xlu0 %v25, 126
    %v61 = vpop.permute.xlu0 %60
    %62 = vrot.lane.b32.xlu0 %v26, 126
    %v63 = vpop.permute.xlu0 %62
    %64 = vrot.lane.b32.xlu0 %v27, 126
    %v65 = vpop.permute.xlu0 %64
    %66 = vrot.lane.b32.xlu0 %v28, 126
    %v67 = vpop.permute.xlu0 %66
    %68 = vrot.lane.b32.xlu0 %v29, 126
    %v69 = vpop.permute.xlu0 %68
    %70 = vrot.lane.b32.xlu0 %v30, 126
    %v71 = vpop.permute.xlu0 %70
    %72 = vrot.lane.b32.xlu0 %v31, 126
    %v73 = vpop.permute.xlu0 %72
    %74 = vrot.lane.b32.xlu0 %v32, 126
    %v75 = vpop.permute.xlu0 %74
    %76 = vrot.lane.b32.xlu0 %v33, 126
    %v77 = vpop.permute.xlu0 %76
    %78 = vrot.lane.b32.xlu0 %v34, 126
    %v79 = vpop.permute.xlu0 %78
    %80 = vrot.lane.b32.xlu0 %v35, 126
    %v81 = vpop.permute.xlu0 %80
    %82 = vrot.lane.b32.xlu0 %v36, 126
    %v83 = vpop.permute.xlu0 %82
    %84 = vrot.lane.b32.xlu0 %v37, 126
    %v85 = vpop.permute.xlu0 %84
    %86 = vrot.lane.b32.xlu0 %v38, 126
    %v87 = vpop.permute.xlu0 %86
    %88 = vrot.lane.b32.xlu0 %v39, 126
    %v89 = vpop.permute.xlu0 %88
    %90 = vrot.lane.b32.xlu0 %v40, 126
    %v91 = vpop.permute.xlu0 %90
    %92 = vrot.lane.b32.xlu0 %v41, 126
    %v93 = vpop.permute.xlu0 %92
    %94 = vrot.lane.b32.xlu0 %v42, 126
    %v95 = vpop.permute.xlu0 %94
    %96 = vrot.lane.b32.xlu0 %v43, 126
    %v97 = vpop.permute.xlu0 %96
    %98 = vrot.lane.b32.xlu0 %v44, 126
    %v99 = vpop.permute.xlu0 %98
    %100 = vrot.lane.b32.xlu0 %v45, 126
    %v101 = vpop.permute.xlu0 %100
    %102 = vrot.lane.b32.xlu0 %v46, 126
    %v103 = vpop.permute.xlu0 %102
    %104 = vrot.lane.b32.xlu0 %v47, 126
    %v105 = vpop.permute.xlu0 %104
    %106 = vrot.lane.b32.xlu0 %v48, 126
    %v107 = vpop.permute.xlu0 %106
    %108 = vrot.lane.b32.xlu0 %v49, 126
    %v109 = vpop.permute.xlu0 %108
    %110 = vrot.lane.b32.xlu0 %v50, 126
    %v111 = vpop.permute.xlu0 %110
    %112 = vrot.lane.b32.xlu0 %v51, 126
    %v113 = vpop.permute.xlu0 %112
    %114 = vrot.lane.b32.xlu0 %v52, 126
    %v115 = vpop.permute.xlu0 %114
    %116 = vrot.lane.b32.xlu0 %v53, 126
    %v117 = vpop.permute.xlu0 %116
    %v118 = vsub.f32 %v55, %v22
    %v119 = vsub.f32 %v57, %v23
    %v120 = vsub.f32 %v59, %v24
    %v121 = vsub.f32 %v61, %v25
    %v122 = vsub.f32 %v63, %v26
    %v123 = vsub.f32 %v65, %v27
    %v124 = vsub.f32 %v67, %v28
    %v125 = vsub.f32 %v69, %v29
    %v126 = vsub.f32 %v71, %v30
    %v127 = vsub.f32 %v73, %v31
    %v128 = vsub.f32 %v75, %v32
    %v129 = vsub.f32 %v77, %v33
    %v130 = vsub.f32 %v79, %v34
    %v131 = vsub.f32 %v81, %v35
    %v132 = vsub.f32 %v83, %v36
    %v133 = vsub.f32 %v85, %v37
    %v134 = vsub.f32 %v87, %v38
    %v135 = vsub.f32 %v89, %v39
    %v136 = vsub.f32 %v91, %v40
    %v137 = vsub.f32 %v93, %v41
    %v138 = vsub.f32 %v95, %v42
    %v139 = vsub.f32 %v97, %v43
    %v140 = vsub.f32 %v99, %v44
    %v141 = vsub.f32 %v101, %v45
    %v142 = vsub.f32 %v103, %v46
    %v143 = vsub.f32 %v105, %v47
    %v144 = vsub.f32 %v107, %v48
    %v145 = vsub.f32 %v109, %v49
    %v146 = vsub.f32 %v111, %v50
    %v147 = vsub.f32 %v113, %v51
    %v148 = vsub.f32 %v115, %v52
    %v149 = vsub.f32 %v117, %v53
    %v150 = vmul.f32 %v118, 2.0
    %v151 = vmul.f32 %v119, 2.0
    %v152 = vmul.f32 %v120, 2.0
    %v153 = vmul.f32 %v121, 2.0
    %v154 = vmul.f32 %v122, 2.0
    %v155 = vmul.f32 %v123, 2.0
    %v156 = vmul.f32 %v124, 2.0
    %v157 = vmul.f32 %v125, 2.0
    %v158 = vmul.f32 %v126, 2.0
    %v159 = vmul.f32 %v127, 2.0
    %v160 = vmul.f32 %v128, 2.0
    %v161 = vmul.f32 %v129, 2.0
    %v162 = vmul.f32 %v130, 2.0
    %v163 = vmul.f32 %v131, 2.0
    %v164 = vmul.f32 %v132, 2.0
    %v165 = vmul.f32 %v133, 2.0
    %v166 = vmul.f32 %v134, 2.0
    %v167 = vmul.f32 %v135, 2.0
    %v168 = vmul.f32 %v136, 2.0
    %v169 = vmul.f32 %v137, 2.0
    %v170 = vmul.f32 %v138, 2.0
    %v171 = vmul.f32 %v139, 2.0
    %v172 = vmul.f32 %v140, 2.0
    %v173 = vmul.f32 %v141, 2.0
    %v174 = vmul.f32 %v142, 2.0
    %v175 = vmul.f32 %v143, 2.0
    %v176 = vmul.f32 %v144, 2.0
    %v177 = vmul.f32 %v145, 2.0
    %v178 = vmul.f32 %v146, 2.0
    %v179 = vmul.f32 %v147, 2.0
    %v180 = vmul.f32 %v148, 2.0
    %v181 = vmul.f32 %v149, 2.0
    %vm214 = vcmask 1046528
    %v215 = vrot.slane %v150, 1
    %v216 = vrot.slane %v151, 1
    %v217 = vsel %vm214, %v215, %v216
    %v218 = vrot.slane %v152, 1
    %v219 = vsel %vm214, %v216, %v218
    %v220 = vrot.slane %v153, 1
    %v221 = vsel %vm214, %v218, %v220
    %v222 = vrot.slane %v154, 1
    %v223 = vsel %vm214, %v220, %v222
    %v224 = vrot.slane %v155, 1
    %v225 = vsel %vm214, %v222, %v224
    %v226 = vrot.slane %v156, 1
    %v227 = vsel %vm214, %v224, %v226
    %v228 = vrot.slane %v157, 1
    %v229 = vsel %vm214, %v226, %v228
    %v230 = vrot.slane %v158, 1
    %v231 = vsel %vm214, %v228, %v230
    %v232 = vrot.slane %v159, 1
    %v233 = vsel %vm214, %v230, %v232
    %v234 = vrot.slane %v160, 1
    %v235 = vsel %vm214, %v232, %v234
    %v236 = vrot.slane %v161, 1
    %v237 = vsel %vm214, %v234, %v236
    %v238 = vrot.slane %v162, 1
    %v239 = vsel %vm214, %v236, %v238
    %v240 = vrot.slane %v163, 1
    %v241 = vsel %vm214, %v238, %v240
    %v242 = vrot.slane %v164, 1
    %v243 = vsel %vm214, %v240, %v242
    %v244 = vrot.slane %v165, 1
    %v245 = vsel %vm214, %v242, %v244
    %v246 = vrot.slane %v166, 1
    %v247 = vrot.slane %v167, 1
    %v248 = vsel %vm214, %v246, %v247
    %v249 = vrot.slane %v168, 1
    %v250 = vsel %vm214, %v247, %v249
    %v251 = vrot.slane %v169, 1
    %v252 = vsel %vm214, %v249, %v251
    %v253 = vrot.slane %v170, 1
    %v254 = vsel %vm214, %v251, %v253
    %v255 = vrot.slane %v171, 1
    %v256 = vsel %vm214, %v253, %v255
    %v257 = vrot.slane %v172, 1
    %v258 = vsel %vm214, %v255, %v257
    %v259 = vrot.slane %v173, 1
    %v260 = vsel %vm214, %v257, %v259
    %v261 = vrot.slane %v174, 1
    %v262 = vsel %vm214, %v259, %v261
    %v263 = vrot.slane %v175, 1
    %v264 = vsel %vm214, %v261, %v263
    %v265 = vrot.slane %v176, 1
    %v266 = vsel %vm214, %v263, %v265
    %v267 = vrot.slane %v177, 1
    %v268 = vsel %vm214, %v265, %v267
    %v269 = vrot.slane %v178, 1
    %v270 = vsel %vm214, %v267, %v269
    %v271 = vrot.slane %v179, 1
    %v272 = vsel %vm214, %v269, %v271
    %v273 = vrot.slane %v180, 1
    %v274 = vsel %vm214, %v271, %v273
    %v275 = vrot.slane %v181, 1
    %v276 = vsel %vm214, %v273, %v275
    %v309 = vadd.f32 %v118, %v217
    %v310 = vadd.f32 %v119, %v219
    %v311 = vadd.f32 %v120, %v221
    %v312 = vadd.f32 %v121, %v223
    %v313 = vadd.f32 %v122, %v225
    %v314 = vadd.f32 %v123, %v227
    %v315 = vadd.f32 %v124, %v229
    %v316 = vadd.f32 %v125, %v231
    %v317 = vadd.f32 %v126, %v233
    %v318 = vadd.f32 %v127, %v235
    %v319 = vadd.f32 %v128, %v237
    %v320 = vadd.f32 %v129, %v239
    %v321 = vadd.f32 %v130, %v241
    %v322 = vadd.f32 %v131, %v243
    %v323 = vadd.f32 %v132, %v245
    %v324 = vadd.f32 %v133, %v244
    %v325 = vadd.f32 %v134, %v248
    %v326 = vadd.f32 %v135, %v250
    %v327 = vadd.f32 %v136, %v252
    %v328 = vadd.f32 %v137, %v254
    %v329 = vadd.f32 %v138, %v256
    %v330 = vadd.f32 %v139, %v258
    %v331 = vadd.f32 %v140, %v260
    %v332 = vadd.f32 %v141, %v262
    %v333 = vadd.f32 %v142, %v264
    %v334 = vadd.f32 %v143, %v266
    %v335 = vadd.f32 %v144, %v268
    %v336 = vadd.f32 %v145, %v270
    %v337 = vadd.f32 %v146, %v272
    %v338 = vadd.f32 %v147, %v274
    %v339 = vadd.f32 %v148, %v276
    %v340 = vadd.f32 %v149, %v275
    %vm373 = vcmask 1045504
    %v374 = vrot.slane %v118, 2
    %v375 = vrot.slane %v119, 2
    %v376 = vsel %vm373, %v374, %v375
    %v377 = vrot.slane %v120, 2
    %v378 = vsel %vm373, %v375, %v377
    %v379 = vrot.slane %v121, 2
    %v380 = vsel %vm373, %v377, %v379
    %v381 = vrot.slane %v122, 2
    %v382 = vsel %vm373, %v379, %v381
    %v383 = vrot.slane %v123, 2
    %v384 = vsel %vm373, %v381, %v383
    %v385 = vrot.slane %v124, 2
    %v386 = vsel %vm373, %v383, %v385
    %v387 = vrot.slane %v125, 2
    %v388 = vsel %vm373, %v385, %v387
    %v389 = vrot.slane %v126, 2
    %v390 = vsel %vm373, %v387, %v389
    %v391 = vrot.slane %v127, 2
    %v392 = vsel %vm373, %v389, %v391
    %v393 = vrot.slane %v128, 2
    %v394 = vsel %vm373, %v391, %v393
    %v395 = vrot.slane %v129, 2
    %v396 = vsel %vm373, %v393, %v395
    %v397 = vrot.slane %v130, 2
    %v398 = vsel %vm373, %v395, %v397
    %v399 = vrot.slane %v131, 2
    %v400 = vsel %vm373, %v397, %v399
    %v401 = vrot.slane %v132, 2
    %v402 = vsel %vm373, %v399, %v401
    %v403 = vrot.slane %v133, 2
    %v404 = vsel %vm373, %v401, %v403
    %v405 = vrot.slane %v134, 2
    %v406 = vrot.slane %v135, 2
    %v407 = vsel %vm373, %v405, %v406
    %v408 = vrot.slane %v136, 2
    %v409 = vsel %vm373, %v406, %v408
    %v410 = vrot.slane %v137, 2
    %v411 = vsel %vm373, %v408, %v410
    %v412 = vrot.slane %v138, 2
    %v413 = vsel %vm373, %v410, %v412
    %v414 = vrot.slane %v139, 2
    %v415 = vsel %vm373, %v412, %v414
    %v416 = vrot.slane %v140, 2
    %v417 = vsel %vm373, %v414, %v416
    %v418 = vrot.slane %v141, 2
    %v419 = vsel %vm373, %v416, %v418
    %v420 = vrot.slane %v142, 2
    %v421 = vsel %vm373, %v418, %v420
    %v422 = vrot.slane %v143, 2
    %v423 = vsel %vm373, %v420, %v422
    %v424 = vrot.slane %v144, 2
    %v425 = vsel %vm373, %v422, %v424
    %v426 = vrot.slane %v145, 2
    %v427 = vsel %vm373, %v424, %v426
    %v428 = vrot.slane %v146, 2
    %v429 = vsel %vm373, %v426, %v428
    %v430 = vrot.slane %v147, 2
    %v431 = vsel %vm373, %v428, %v430
    %v432 = vrot.slane %v148, 2
    %v433 = vsel %vm373, %v430, %v432
    %v434 = vrot.slane %v149, 2
    %v435 = vsel %vm373, %v432, %v434
    %v468 = vadd.f32 %v309, %v376
    %v469 = vadd.f32 %v310, %v378
    %v470 = vadd.f32 %v311, %v380
    %v471 = vadd.f32 %v312, %v382
    %v472 = vadd.f32 %v313, %v384
    %v473 = vadd.f32 %v314, %v386
    %v474 = vadd.f32 %v315, %v388
    %v475 = vadd.f32 %v316, %v390
    %v476 = vadd.f32 %v317, %v392
    %v477 = vadd.f32 %v318, %v394
    %v478 = vadd.f32 %v319, %v396
    %v479 = vadd.f32 %v320, %v398
    %v480 = vadd.f32 %v321, %v400
    %v481 = vadd.f32 %v322, %v402
    %v482 = vadd.f32 %v323, %v404
    %v483 = vadd.f32 %v324, %v403
    %v484 = vadd.f32 %v325, %v407
    %v485 = vadd.f32 %v326, %v409
    %v486 = vadd.f32 %v327, %v411
    %v487 = vadd.f32 %v328, %v413
    %v488 = vadd.f32 %v329, %v415
    %v489 = vadd.f32 %v330, %v417
    %v490 = vadd.f32 %v331, %v419
    %v491 = vadd.f32 %v332, %v421
    %v492 = vadd.f32 %v333, %v423
    %v493 = vadd.f32 %v334, %v425
    %v494 = vadd.f32 %v335, %v427
    %v495 = vadd.f32 %v336, %v429
    %v496 = vadd.f32 %v337, %v431
    %v497 = vadd.f32 %v338, %v433
    %v498 = vadd.f32 %v339, %v435
    %v499 = vadd.f32 %v340, %v434
    %v500 = vand.u32 2147483647, %v468
    %v501 = vand.u32 2147483647, %v469
    %v502 = vand.u32 2147483647, %v470
    %v503 = vand.u32 2147483647, %v471
    %v504 = vand.u32 2147483647, %v472
    %v505 = vand.u32 2147483647, %v473
    %v506 = vand.u32 2147483647, %v474
    %v507 = vand.u32 2147483647, %v475
    %v508 = vand.u32 2147483647, %v476
    %v509 = vand.u32 2147483647, %v477
    %v510 = vand.u32 2147483647, %v478
    %v511 = vand.u32 2147483647, %v479
    %v512 = vand.u32 2147483647, %v480
    %v513 = vand.u32 2147483647, %v481
    %v514 = vand.u32 2147483647, %v482
    %v515 = vand.u32 2147483647, %v483
    %v516 = vand.u32 2147483647, %v484
    %v517 = vand.u32 2147483647, %v485
    %v518 = vand.u32 2147483647, %v486
    %v519 = vand.u32 2147483647, %v487
    %v520 = vand.u32 2147483647, %v488
    %v521 = vand.u32 2147483647, %v489
    %v522 = vand.u32 2147483647, %v490
    %v523 = vand.u32 2147483647, %v491
    %v524 = vand.u32 2147483647, %v492
    %v525 = vand.u32 2147483647, %v493
    %v526 = vand.u32 2147483647, %v494
    %v527 = vand.u32 2147483647, %v495
    %v528 = vand.u32 2147483647, %v496
    %v529 = vand.u32 2147483647, %v497
    %v530 = vand.u32 2147483647, %v498
    %v531 = vand.u32 2147483647, %v499
    %v532 = vmul.f32 %v500, 2.0
    %v533 = vmul.f32 %v501, 2.0
    %v534 = vmul.f32 %v502, 2.0
    %v535 = vmul.f32 %v503, 2.0
    %v536 = vmul.f32 %v504, 2.0
    %v537 = vmul.f32 %v505, 2.0
    %v538 = vmul.f32 %v506, 2.0
    %v539 = vmul.f32 %v507, 2.0
    %v540 = vmul.f32 %v508, 2.0
    %v541 = vmul.f32 %v509, 2.0
    %v542 = vmul.f32 %v510, 2.0
    %v543 = vmul.f32 %v511, 2.0
    %v544 = vmul.f32 %v512, 2.0
    %v545 = vmul.f32 %v513, 2.0
    %v546 = vmul.f32 %v514, 2.0
    %v547 = vmul.f32 %v515, 2.0
    %v548 = vmul.f32 %v516, 2.0
    %v549 = vmul.f32 %v517, 2.0
    %v550 = vmul.f32 %v518, 2.0
    %v551 = vmul.f32 %v519, 2.0
    %v552 = vmul.f32 %v520, 2.0
    %v553 = vmul.f32 %v521, 2.0
    %v554 = vmul.f32 %v522, 2.0
    %v555 = vmul.f32 %v523, 2.0
    %v556 = vmul.f32 %v524, 2.0
    %v557 = vmul.f32 %v525, 2.0
    %v558 = vmul.f32 %v526, 2.0
    %v559 = vmul.f32 %v527, 2.0
    %v560 = vmul.f32 %v528, 2.0
    %v561 = vmul.f32 %v529, 2.0
    %v562 = vmul.f32 %v530, 2.0
    %v563 = vmul.f32 %v531, 2.0
    %vm564 = vcmask 1031168
    %565 = vst.msk [vmem:[%s1] sm:$0xff] %vm564, %v532
    %566 = vst.msk [vmem:[%s1 + $0x8] sm:$0xff] %vm564, %v533
    %567 = vst.msk [vmem:[%s1 + $0x10] sm:$0xff] %vm564, %v534
    %568 = vst.msk [vmem:[%s1 + $0x18] sm:$0xff] %vm564, %v535
    %569 = vst.msk [vmem:[%s1 + $0x20] sm:$0xff] %vm564, %v536
    %570 = vst.msk [vmem:[%s1 + $0x28] sm:$0xff] %vm564, %v537
    %571 = vst.msk [vmem:[%s1 + $0x30] sm:$0xff] %vm564, %v538
    %572 = vst.msk [vmem:[%s1 + $0x38] sm:$0xff] %vm564, %v539
    %573 = vst.msk [vmem:[%s1 + $0x40] sm:$0xff] %vm564, %v540
    %574 = vst.msk [vmem:[%s1 + $0x48] sm:$0xff] %vm564, %v541
    %575 = vst.msk [vmem:[%s1 + $0x50] sm:$0xff] %vm564, %v542
    %576 = vst.msk [vmem:[%s1 + $0x58] sm:$0xff] %vm564, %v543
    %577 = vst.msk [vmem:[%s1 + $0x60] sm:$0xff] %vm564, %v544
    %578 = vst.msk [vmem:[%s1 + $0x68] sm:$0xff] %vm564, %v545
    %579 = vst.msk [vmem:[%s1 + $0x70] sm:$0xff] %vm564, %v546
    %vm580 = vcmask 1029120
    %581 = vst.msk [vmem:[%s1 + $0x78] sm:$0x3f] %vm580, %v547
    %582 = vst.msk [vmem:[%s1 + $0x80] sm:$0xff] %vm564, %v548
    %583 = vst.msk [vmem:[%s1 + $0x88] sm:$0xff] %vm564, %v549
    %584 = vst.msk [vmem:[%s1 + $0x90] sm:$0xff] %vm564, %v550
    %585 = vst.msk [vmem:[%s1 + $0x98] sm:$0xff] %vm564, %v551
    %586 = vst.msk [vmem:[%s1 + $0xa0] sm:$0xff] %vm564, %v552
    %587 = vst.msk [vmem:[%s1 + $0xa8] sm:$0xff] %vm564, %v553
    %588 = vst.msk [vmem:[%s1 + $0xb0] sm:$0xff] %vm564, %v554
    %589 = vst.msk [vmem:[%s1 + $0xb8] sm:$0xff] %vm564, %v555
    %590 = vst.msk [vmem:[%s1 + $0xc0] sm:$0xff] %vm564, %v556
    %591 = vst.msk [vmem:[%s1 + $0xc8] sm:$0xff] %vm564, %v557
    %592 = vst.msk [vmem:[%s1 + $0xd0] sm:$0xff] %vm564, %v558
    %593 = vst.msk [vmem:[%s1 + $0xd8] sm:$0xff] %vm564, %v559
    %594 = vst.msk [vmem:[%s1 + $0xe0] sm:$0xff] %vm564, %v560
    %595 = vst.msk [vmem:[%s1 + $0xe8] sm:$0xff] %vm564, %v561
    %596 = vst.msk [vmem:[%s1 + $0xf0] sm:$0xff] %vm564, %v562
    %597 = vst.msk [vmem:[%s1 + $0xf8] sm:$0x3f] %vm580, %v563
    // Predicated region
    $region10: #{tpu_custom_call.1} parent=1 // pred_check
      _
    $region11: #{tpu_custom_call.1} parent=1 // pred_check_branch
      %599 = sbr.rel (0) target = $region13
    $region12: #{tpu_custom_call.1} parent=1 // pred_region
      _
    $region13: #{tpu_custom_call.1} parent=1 // pred_fallthru
      _
    // Predicated region
    $region14: #{tpu_custom_call.1} parent=1 // pred_check
      _
    $region15: #{tpu_custom_call.1} parent=1 // pred_check_branch
      %601 = sbr.rel (0) target = $region17
    $region16: #{tpu_custom_call.1} parent=1 // pred_region
      _
    $region17: #{tpu_custom_call.1} parent=1 // pred_fallthru
      _
    %602 = vsyncpa [#allocation3], 1

</llo_original>
